<compile_context>
chip_gen: v7x
topology: tpu7x:2x2x1
jax: 0.10.0
libtpu: 0.0.40
codegen_flags: <defaults>
</compile_context>

<pallas_src>
import jax
import jax.numpy as jnp
import numpy as np
from jax.experimental import pallas as pl
from jax.experimental.pallas import tpu as pltpu


def _h_swish(v):
    # x * relu6(x + 3) / 6
    return v * (jnp.clip(v + 3.0, 0.0, 6.0) / 6.0)


def coor_attention_kernel(x_ref, ah_ref, aw_ref, eh_ref, ew_ref,
                          w1_ref, b1_ref, wx_ref, bx_ref, wy_ref, by_ref,
                          o_ref):
    # x_ref block: (BB, C, H*W), lane-dense, native dtype.
    BB, C, HW = x_ref.shape
    H = ah_ref.shape[1]
    W = aw_ref.shape[1]

    # Flatten the batch block into the sublane axis: one big lane-dense 2-D
    # slab for the pooling/expansion matmuls and the final multiply.
    x = x_ref[...].reshape(BB * C, HW)

    # --- coordinate pooling as MXU matmuls against constant selection
    #     matrices (mean scales 1/W, 1/H already folded in), f32 accumulate --
    pool_h = jnp.dot(x, ah_ref[...], preferred_element_type=jnp.float32)  # (BB*C, H)
    pool_w = jnp.dot(x, aw_ref[...], preferred_element_type=jnp.float32)  # (BB*C, W)

    w1 = w1_ref[...]; b1 = b1_ref[...]
    wx = wx_ref[...]; bx = bx_ref[...]
    wy = wy_ref[...]; by = by_ref[...]

    # --- tiny per-sample conv1 (BN folded) + h_swish + convx/convy + sigmoid,
    #     statically unrolled over the batch block (negligible work) ---------
    att_h_blocks = []
    att_w_blocks = []
    for b in range(BB):
        ph = pool_h[b * C:(b + 1) * C, :]                       # (C, H) f32
        pw = pool_w[b * C:(b + 1) * C, :]                       # (C, W) f32
        yh = _h_swish(jnp.dot(w1, ph, preferred_element_type=jnp.float32) + b1)
        yw = _h_swish(jnp.dot(w1, pw, preferred_element_type=jnp.float32) + b1)
        att_h_blocks.append(jax.nn.sigmoid(
            jnp.dot(wx, yh, preferred_element_type=jnp.float32) + bx))   # (C, H)
        att_w_blocks.append(jax.nn.sigmoid(
            jnp.dot(wy, yw, preferred_element_type=jnp.float32) + by))   # (C, W)
    att_h = att_h_blocks[0] if BB == 1 else jnp.concatenate(att_h_blocks, axis=0)
    att_w = att_w_blocks[0] if BB == 1 else jnp.concatenate(att_w_blocks, axis=0)

    # --- expand the attention maps back onto the flat lane-dense spatial
    #     axis via exact 0/1 expansion matmuls, kept in f32 until the final
    #     multiply (no low-precision attention values) -----------------------
    att_h_e = jnp.dot(att_h, eh_ref[...], preferred_element_type=jnp.float32)
    att_w_e = jnp.dot(att_w, ew_ref[...], preferred_element_type=jnp.float32)
    att = (att_h_e * att_w_e).astype(x.dtype)

    o_ref[...] = (x * att).reshape(BB, C, HW).astype(o_ref.dtype)


def _pick_block_batch(B, C, hw, H, W, itemsize):
    """Largest batch block (<=8) dividing B that keeps >=2 grid steps (so
    dimension_semantics=("parallel",) feeds both v7x TensorCores) and whose
    per-step working set fits a v7x-safe VMEM budget."""
    budget = 48 << 20
    best = 1
    for bb in range(1, min(8, B) + 1):
        if B % bb:
            continue
        if bb > 1 and B // bb < 2:
            continue
        work = (4 * bb * C * hw * itemsize          # x/out double buffers
                + 3 * bb * C * hw * 4               # f32 temporaries
                + 2 * (hw * (H + W) * itemsize + (H + W) * hw * 4))
        if work <= budget:
            best = bb
    return best


@jax.jit
def coor_attention(x, w1, b1, gamma, beta, running_mean, running_var,
                   wx, bx, wy, by, eps=1e-5):
    B, C, H, W = x.shape
    hw = H * W
    mid = w1.shape[0]
    out_ch = wx.shape[0]
    # identity * att_h * att_w requires matching channel counts.
    assert out_ch == C, "CoorAttention broadcast requires out_channels == in_channels"
    dt = x.dtype
    itemsize = jnp.dtype(dt).itemsize

    # Fold eval-mode BatchNorm into conv1:  BN(W p + b) = (s*W) p + (s*(b-mu)+beta)
    s = gamma / jnp.sqrt(running_var + eps)
    w1f = (w1 * s[:, None]).astype(jnp.float32)
    b1f = (s * (b1 - running_mean) + beta).reshape(mid, 1).astype(jnp.float32)
    bx2 = bx.reshape(out_ch, 1).astype(jnp.float32)
    by2 = by.reshape(out_ch, 1).astype(jnp.float32)

    # Constant pooling-selection matrices (mean scale folded in, x's dtype so
    # the big x path never upcasts) and f32 0/1 expansion matrices.
    pos = np.arange(hw)
    sel_h = (pos[:, None] // W == np.arange(H)[None, :]).astype(np.float32)  # (HW, H)
    sel_w = (pos[:, None] % W == np.arange(W)[None, :]).astype(np.float32)   # (HW, W)
    ah = jnp.asarray(sel_h * (1.0 / W), dtype=dt)
    aw = jnp.asarray(sel_w * (1.0 / H), dtype=dt)
    eh = jnp.asarray(np.ascontiguousarray(sel_h.T), dtype=jnp.float32)       # (H, HW)
    ew = jnp.asarray(np.ascontiguousarray(sel_w.T), dtype=jnp.float32)       # (W, HW)

    # Lane-dense view of the activation (free reshape of contiguous dims).
    x2 = x.reshape(B, C, hw)

    BB = _pick_block_batch(B, C, hw, H, W, itemsize)
    grid = (B // BB,)

    # Per-generation VMEM budget: actual working set + headroom, capped under
    # the physical VMEM of the chip we are compiling for.
    work_bytes = (4 * BB * C * hw * itemsize
                  + 3 * BB * C * hw * 4
                  + 2 * (hw * (H + W) * itemsize + (H + W) * hw * 4)
                  + 2 * (mid * C + 2 * out_ch * mid + mid + 2 * out_ch) * 4)
    try:
        phys_vmem = int(pltpu.get_tpu_info().vmem_capacity_bytes)
    except Exception:
        phys_vmem = 64 << 20
    vmem_limit = int(max(32 << 20, min(work_bytes + (8 << 20),
                                       phys_vmem - (8 << 20))))

    bytes_accessed = int(2 * B * C * hw * itemsize
                         + hw * (H + W) * itemsize + (H + W) * hw * 4
                         + (mid * C + 2 * out_ch * mid + mid + 2 * out_ch) * 4)
    flops = int(B * (2 * C * hw * (H + W)           # pooling matmuls
                     + 2 * mid * C * (H + W)        # conv1
                     + 2 * out_ch * mid * (H + W)   # convx / convy
                     + 2 * out_ch * (H + W) * hw    # expansion matmuls
                     + 2 * C * hw))                 # elementwise multiplies
    transcendentals = int(B * out_ch * (H + W))     # sigmoids

    full = lambda shape: pl.BlockSpec(shape, lambda i: (0,) * len(shape))

    out2 = pl.pallas_call(
        coor_attention_kernel,
        out_shape=jax.ShapeDtypeStruct((B, C, hw), dt),
        grid_spec=pltpu.PrefetchScalarGridSpec(
            num_scalar_prefetch=0,
            grid=grid,
            in_specs=[
                pl.BlockSpec((BB, C, hw), lambda i: (i, 0, 0)),  # x block
                full((hw, H)),        # pooling selection, H branch (1/W folded)
                full((hw, W)),        # pooling selection, W branch (1/H folded)
                full((H, hw)),        # expansion, H branch (f32 0/1)
                full((W, hw)),        # expansion, W branch (f32 0/1)
                full((mid, C)),       # conv1 weight (BN folded)
                full((mid, 1)),       # conv1 bias   (BN folded)
                full((out_ch, mid)),  # convx weight
                full((out_ch, 1)),    # convx bias
                full((out_ch, mid)),  # convy weight
                full((out_ch, 1)),    # convy bias
            ],
            out_specs=pl.BlockSpec((BB, C, hw), lambda i: (i, 0, 0)),
        ),
        compiler_params=pltpu.CompilerParams(
            dimension_semantics=("parallel",),
            vmem_limit_bytes=vmem_limit),
        cost_estimate=pl.CostEstimate(flops=flops,
                                      transcendentals=transcendentals,
                                      bytes_accessed=bytes_accessed),
    )(x2, ah, aw, eh, ew,
      w1f, b1f, wx.astype(jnp.float32), bx2, wy.astype(jnp.float32), by2)

    return out2.reshape(B, C, H, W)


def reference_forward(x, w1, b1, gamma, beta, rmean, rvar, wx, bx, wy, by,
                      eps=1e-5):
    """Pure-JAX reference mirroring the PyTorch forward (eval-mode BN)."""
    B, C, H, W = x.shape
    pool_h = x.mean(axis=3)                             # (B, C, H)
    pool_w = x.mean(axis=2)                             # (B, C, W)
    pool = jnp.concatenate([pool_h, pool_w], axis=2)    # (B, C, H+W)
    y = jnp.einsum('mc,bcs->bms', w1, pool) + b1[None, :, None]
    y = (y - rmean[None, :, None]) / jnp.sqrt(rvar[None, :, None] + eps)
    y = y * gamma[None, :, None] + beta[None, :, None]
    y = y * (jnp.clip(y + 3.0, 0.0, 6.0) / 6.0)
    y_h, y_w = y[:, :, :H], y[:, :, H:]
    att_h = jax.nn.sigmoid(jnp.einsum('om,bms->bos', wx, y_h)
                           + bx[None, :, None])         # (B, O, H)
    att_w = jax.nn.sigmoid(jnp.einsum('om,bms->bos', wy, y_w)
                           + by[None, :, None])         # (B, O, W)
    return x * att_h[:, :, :, None] * att_w[:, :, None, :]


if __name__ == "__main__":
    # Small shapes consistent with the module: in_channels == out_channels
    # (required for the final broadcast multiply), reduction=32.
    C, H, W = 16, 16, 16
    reduction = 32
    mid = max(8, C // reduction)      # = 8
    out_ch = C
    eps = 1e-5

    key = jax.random.PRNGKey(0)
    keys = jax.random.split(key, 12)

    # Deterministic synthetic parameters (Conv2d 1x1 weights used as matmuls).
    w1 = jax.random.normal(keys[1], (mid, C), dtype=jnp.float32) * 0.2
    b1 = jax.random.normal(keys[2], (mid,), dtype=jnp.float32) * 0.1
    gamma = 1.0 + 0.1 * jax.random.normal(keys[3], (mid,), dtype=jnp.float32)
    beta = 0.1 * jax.random.normal(keys[4], (mid,), dtype=jnp.float32)
    rmean = 0.05 * jax.random.normal(keys[5], (mid,), dtype=jnp.float32)
    rvar = 1.0 + 0.1 * jnp.abs(jax.random.normal(keys[6], (mid,),
                                                 dtype=jnp.float32))
    wx = jax.random.normal(keys[7], (out_ch, mid), dtype=jnp.float32) * 0.2
    bx = jax.random.normal(keys[8], (out_ch,), dtype=jnp.float32) * 0.1
    wy = jax.random.normal(keys[9], (out_ch, mid), dtype=jnp.float32) * 0.2
    by = jax.random.normal(keys[10], (out_ch,), dtype=jnp.float32) * 0.1

    # Config 1: B=2 -> BB=1, grid=(2,)  (per-sample path; both v7x TCs fed)
    x1 = jax.random.normal(keys[0], (2, C, H, W), dtype=jnp.float32)
    out1 = jax.block_until_ready(
        coor_attention(x1, w1, b1, gamma, beta, rmean, rvar, wx, bx, wy, by, eps))
    ref1 = jax.block_until_ready(
        reference_forward(x1, w1, b1, gamma, beta, rmean, rvar, wx, bx, wy, by, eps=eps))
    np.testing.assert_allclose(np.asarray(out1), np.asarray(ref1),
                               rtol=2e-5, atol=2e-5)

    # Config 2: B=4 -> BB=2, grid=(2,)  (exercises the batch-blocked path)
    x2 = jax.random.normal(keys[11], (4, C, H, W), dtype=jnp.float32)
    out2 = jax.block_until_ready(
        coor_attention(x2, w1, b1, gamma, beta, rmean, rvar, wx, bx, wy, by, eps))
    ref2 = jax.block_until_ready(
        reference_forward(x2, w1, b1, gamma, beta, rmean, rvar, wx, bx, wy, by, eps=eps))
    np.testing.assert_allclose(np.asarray(out2), np.asarray(ref2),
                               rtol=2e-5, atol=2e-5)

    print("KERNEL_OK")
</pallas_src>

<mosaic_0001>
module attributes {stable_mosaic.version = 11 : i64} {
  func.func @coor_attention_kernel(%arg0: i32, %arg1: memref<1x16x256xf32, #tpu.memory_space<vmem>>, %arg2: memref<256x16xf32, #tpu.memory_space<vmem>>, %arg3: memref<256x16xf32, #tpu.memory_space<vmem>>, %arg4: memref<16x256xf32, #tpu.memory_space<vmem>>, %arg5: memref<16x256xf32, #tpu.memory_space<vmem>>, %arg6: memref<8x16xf32, #tpu.memory_space<vmem>>, %arg7: memref<8x1xf32, #tpu.memory_space<vmem>>, %arg8: memref<16x8xf32, #tpu.memory_space<vmem>>, %arg9: memref<16x1xf32, #tpu.memory_space<vmem>>, %arg10: memref<16x8xf32, #tpu.memory_space<vmem>>, %arg11: memref<16x1xf32, #tpu.memory_space<vmem>>, %arg12: memref<1x16x256xf32, #tpu.memory_space<vmem>>) attributes {dimension_semantics = [#tpu.dimension_semantics<parallel>], iteration_bounds = array<i64: 2>, scalar_prefetch = 0 : i64, scratch_operands = 0 : i64, tpu.core_type = #tpu.core_type<tc>, window_params = [{transform_indices = @transform_0, window_bounds = array<i64: 1, 16, 256>}, {pipeline_mode = #tpu.pipeline_mode<synchronous>, transform_indices = @transform_1, window_bounds = array<i64: 256, 16>}, {pipeline_mode = #tpu.pipeline_mode<synchronous>, transform_indices = @transform_2, window_bounds = array<i64: 256, 16>}, {pipeline_mode = #tpu.pipeline_mode<synchronous>, transform_indices = @transform_3, window_bounds = array<i64: 16, 256>}, {pipeline_mode = #tpu.pipeline_mode<synchronous>, transform_indices = @transform_4, window_bounds = array<i64: 16, 256>}, {pipeline_mode = #tpu.pipeline_mode<synchronous>, transform_indices = @transform_5, window_bounds = array<i64: 8, 16>}, {pipeline_mode = #tpu.pipeline_mode<synchronous>, transform_indices = @transform_6, window_bounds = array<i64: 8, 1>}, {pipeline_mode = #tpu.pipeline_mode<synchronous>, transform_indices = @transform_7, window_bounds = array<i64: 16, 8>}, {pipeline_mode = #tpu.pipeline_mode<synchronous>, transform_indices = @transform_8, window_bounds = array<i64: 16, 1>}, {pipeline_mode = #tpu.pipeline_mode<synchronous>, transform_indices = @transform_9, window_bounds = array<i64: 16, 8>}, {pipeline_mode = #tpu.pipeline_mode<synchronous>, transform_indices = @transform_10, window_bounds = array<i64: 16, 1>}, {transform_indices = @transform_11, window_bounds = array<i64: 1, 16, 256>}]} {
    %c0 = arith.constant 0 : index
    %c0_0 = arith.constant 0 : index
    %c0_1 = arith.constant 0 : index
    %0 = vector.load %arg1[%c0, %c0_0, %c0_1] : memref<1x16x256xf32, #tpu.memory_space<vmem>>, vector<1x16x256xf32>
    %1 = vector.shape_cast %0 : vector<1x16x256xf32> to vector<16x256xf32>
    %c0_2 = arith.constant 0 : index
    %c0_3 = arith.constant 0 : index
    %2 = vector.load %arg2[%c0_2, %c0_3] : memref<256x16xf32, #tpu.memory_space<vmem>>, vector<256x16xf32>
    %cst = arith.constant dense<0.000000e+00> : vector<16x16xf32>
    %3 = tpu.matmul %1, %2, %cst {dimension_numbers = #tpu.dot_dimension_numbers<[1], [0], [0], [1], [0, 0, 1, 1], [], []>} : vector<16x256xf32>, vector<256x16xf32>, vector<16x16xf32> -> vector<16x16xf32>
    %c0_4 = arith.constant 0 : index
    %c0_5 = arith.constant 0 : index
    %4 = vector.load %arg3[%c0_4, %c0_5] : memref<256x16xf32, #tpu.memory_space<vmem>>, vector<256x16xf32>
    %cst_6 = arith.constant dense<0.000000e+00> : vector<16x16xf32>
    %5 = tpu.matmul %1, %4, %cst_6 {dimension_numbers = #tpu.dot_dimension_numbers<[1], [0], [0], [1], [0, 0, 1, 1], [], []>} : vector<16x256xf32>, vector<256x16xf32>, vector<16x16xf32> -> vector<16x16xf32>
    %c0_7 = arith.constant 0 : index
    %c0_8 = arith.constant 0 : index
    %6 = vector.load %arg6[%c0_7, %c0_8] : memref<8x16xf32, #tpu.memory_space<vmem>>, vector<8x16xf32>
    %c0_9 = arith.constant 0 : index
    %c0_10 = arith.constant 0 : index
    %7 = vector.load %arg7[%c0_9, %c0_10] : memref<8x1xf32, #tpu.memory_space<vmem>>, vector<8x1xf32>
    %c0_11 = arith.constant 0 : index
    %c0_12 = arith.constant 0 : index
    %8 = vector.load %arg8[%c0_11, %c0_12] : memref<16x8xf32, #tpu.memory_space<vmem>>, vector<16x8xf32>
    %c0_13 = arith.constant 0 : index
    %c0_14 = arith.constant 0 : index
    %9 = vector.load %arg9[%c0_13, %c0_14] : memref<16x1xf32, #tpu.memory_space<vmem>>, vector<16x1xf32>
    %c0_15 = arith.constant 0 : index
    %c0_16 = arith.constant 0 : index
    %10 = vector.load %arg10[%c0_15, %c0_16] : memref<16x8xf32, #tpu.memory_space<vmem>>, vector<16x8xf32>
    %c0_17 = arith.constant 0 : index
    %c0_18 = arith.constant 0 : index
    %11 = vector.load %arg11[%c0_17, %c0_18] : memref<16x1xf32, #tpu.memory_space<vmem>>, vector<16x1xf32>
    %cst_19 = arith.constant dense<0.000000e+00> : vector<8x16xf32>
    %12 = tpu.matmul %6, %3, %cst_19 {dimension_numbers = #tpu.dot_dimension_numbers<[1], [0], [0], [1], [0, 0, 1, 1], [], []>} : vector<8x16xf32>, vector<16x16xf32>, vector<8x16xf32> -> vector<8x16xf32>
    %13 = vector.broadcast %7 : vector<8x1xf32> to vector<8x16xf32>
    %14 = arith.addf %12, %13 : vector<8x16xf32>
    %cst_20 = arith.constant 3.000000e+00 : f32
    %15 = vector.broadcast %cst_20 : f32 to vector<8x16xf32>
    %16 = arith.addf %14, %15 : vector<8x16xf32>
    %cst_21 = arith.constant 0.000000e+00 : f32
    %cst_22 = arith.constant 6.000000e+00 : f32
    %17 = vector.broadcast %cst_21 : f32 to vector<8x16xf32>
    %18 = arith.maximumf %17, %16 : vector<8x16xf32>
    %19 = vector.broadcast %cst_22 : f32 to vector<8x16xf32>
    %20 = arith.minimumf %19, %18 : vector<8x16xf32>
    %cst_23 = arith.constant 6.000000e+00 : f32
    %21 = vector.broadcast %cst_23 : f32 to vector<8x16xf32>
    %22 = arith.divf %20, %21 : vector<8x16xf32>
    %23 = arith.mulf %14, %22 : vector<8x16xf32>
    %cst_24 = arith.constant dense<0.000000e+00> : vector<8x16xf32>
    %24 = tpu.matmul %6, %5, %cst_24 {dimension_numbers = #tpu.dot_dimension_numbers<[1], [0], [0], [1], [0, 0, 1, 1], [], []>} : vector<8x16xf32>, vector<16x16xf32>, vector<8x16xf32> -> vector<8x16xf32>
    %25 = vector.broadcast %7 : vector<8x1xf32> to vector<8x16xf32>
    %26 = arith.addf %24, %25 : vector<8x16xf32>
    %cst_25 = arith.constant 3.000000e+00 : f32
    %27 = vector.broadcast %cst_25 : f32 to vector<8x16xf32>
    %28 = arith.addf %26, %27 : vector<8x16xf32>
    %cst_26 = arith.constant 0.000000e+00 : f32
    %cst_27 = arith.constant 6.000000e+00 : f32
    %29 = vector.broadcast %cst_26 : f32 to vector<8x16xf32>
    %30 = arith.maximumf %29, %28 : vector<8x16xf32>
    %31 = vector.broadcast %cst_27 : f32 to vector<8x16xf32>
    %32 = arith.minimumf %31, %30 : vector<8x16xf32>
    %cst_28 = arith.constant 6.000000e+00 : f32
    %33 = vector.broadcast %cst_28 : f32 to vector<8x16xf32>
    %34 = arith.divf %32, %33 : vector<8x16xf32>
    %35 = arith.mulf %26, %34 : vector<8x16xf32>
    %cst_29 = arith.constant dense<0.000000e+00> : vector<16x16xf32>
    %36 = tpu.matmul %8, %23, %cst_29 {dimension_numbers = #tpu.dot_dimension_numbers<[1], [0], [0], [1], [0, 0, 1, 1], [], []>} : vector<16x8xf32>, vector<8x16xf32>, vector<16x16xf32> -> vector<16x16xf32>
    %37 = vector.broadcast %9 : vector<16x1xf32> to vector<16x16xf32>
    %38 = arith.addf %36, %37 : vector<16x16xf32>
    %39 = arith.negf %38 : vector<16x16xf32>
    %40 = math.exp %39 : vector<16x16xf32>
    %cst_30 = arith.constant 1.000000e+00 : f32
    %41 = vector.broadcast %cst_30 : f32 to vector<16x16xf32>
    %42 = arith.addf %41, %40 : vector<16x16xf32>
    %43 = arith.divf %41, %42 : vector<16x16xf32>
    %cst_31 = arith.constant dense<0.000000e+00> : vector<16x16xf32>
    %44 = tpu.matmul %10, %35, %cst_31 {dimension_numbers = #tpu.dot_dimension_numbers<[1], [0], [0], [1], [0, 0, 1, 1], [], []>} : vector<16x8xf32>, vector<8x16xf32>, vector<16x16xf32> -> vector<16x16xf32>
    %45 = vector.broadcast %11 : vector<16x1xf32> to vector<16x16xf32>
    %46 = arith.addf %44, %45 : vector<16x16xf32>
    %47 = arith.negf %46 : vector<16x16xf32>
    %48 = math.exp %47 : vector<16x16xf32>
    %cst_32 = arith.constant 1.000000e+00 : f32
    %49 = vector.broadcast %cst_32 : f32 to vector<16x16xf32>
    %50 = arith.addf %49, %48 : vector<16x16xf32>
    %51 = arith.divf %49, %50 : vector<16x16xf32>
    %c0_33 = arith.constant 0 : index
    %c0_34 = arith.constant 0 : index
    %52 = vector.load %arg4[%c0_33, %c0_34] : memref<16x256xf32, #tpu.memory_space<vmem>>, vector<16x256xf32>
    %cst_35 = arith.constant dense<0.000000e+00> : vector<16x256xf32>
    %53 = tpu.matmul %43, %52, %cst_35 {dimension_numbers = #tpu.dot_dimension_numbers<[1], [0], [0], [1], [0, 0, 1, 1], [], []>} : vector<16x16xf32>, vector<16x256xf32>, vector<16x256xf32> -> vector<16x256xf32>
    %c0_36 = arith.constant 0 : index
    %c0_37 = arith.constant 0 : index
    %54 = vector.load %arg5[%c0_36, %c0_37] : memref<16x256xf32, #tpu.memory_space<vmem>>, vector<16x256xf32>
    %cst_38 = arith.constant dense<0.000000e+00> : vector<16x256xf32>
    %55 = tpu.matmul %51, %54, %cst_38 {dimension_numbers = #tpu.dot_dimension_numbers<[1], [0], [0], [1], [0, 0, 1, 1], [], []>} : vector<16x16xf32>, vector<16x256xf32>, vector<16x256xf32> -> vector<16x256xf32>
    %56 = arith.mulf %53, %55 : vector<16x256xf32>
    %57 = arith.mulf %1, %56 : vector<16x256xf32>
    %58 = vector.shape_cast %57 : vector<16x256xf32> to vector<1x16x256xf32>
    %c0_39 = arith.constant 0 : index
    %c0_40 = arith.constant 0 : index
    %c0_41 = arith.constant 0 : index
    %59 = vector.load %arg12[%c0_39, %c0_40, %c0_41] : memref<1x16x256xf32, #tpu.memory_space<vmem>>, vector<1x16x256xf32>
    tpu.vector_store %arg12[%c0_39, %c0_40, %c0_41], %58 {strides = array<i32>} : memref<1x16x256xf32, #tpu.memory_space<vmem>>, vector<1x16x256xf32>,
    return
  }
  func.func @transform_0(%arg0: i32) -> (i32, i32, i32) {
    %c0_i32 = arith.constant 0 : i32
    %c0_i32_0 = arith.constant 0 : i32
    %c0_i32_1 = arith.constant 0 : i32
    return %arg0, %c0_i32, %c0_i32_0 : i32, i32, i32
  }
  func.func @transform_1(%arg0: i32) -> (i32, i32) {
    %c0_i32 = arith.constant 0 : i32
    %c0_i32_0 = arith.constant 0 : i32
    %c0_i32_1 = arith.constant 0 : i32
    return %c0_i32, %c0_i32_0 : i32, i32
  }
  func.func @transform_2(%arg0: i32) -> (i32, i32) {
    %c0_i32 = arith.constant 0 : i32
    %c0_i32_0 = arith.constant 0 : i32
    %c0_i32_1 = arith.constant 0 : i32
    return %c0_i32, %c0_i32_0 : i32, i32
  }
  func.func @transform_3(%arg0: i32) -> (i32, i32) {
    %c0_i32 = arith.constant 0 : i32
    %c0_i32_0 = arith.constant 0 : i32
    %c0_i32_1 = arith.constant 0 : i32
    return %c0_i32, %c0_i32_0 : i32, i32
  }
  func.func @transform_4(%arg0: i32) -> (i32, i32) {
    %c0_i32 = arith.constant 0 : i32
    %c0_i32_0 = arith.constant 0 : i32
    %c0_i32_1 = arith.constant 0 : i32
    return %c0_i32, %c0_i32_0 : i32, i32
  }
  func.func @transform_5(%arg0: i32) -> (i32, i32) {
    %c0_i32 = arith.constant 0 : i32
    %c0_i32_0 = arith.constant 0 : i32
    %c0_i32_1 = arith.constant 0 : i32
    return %c0_i32, %c0_i32_0 : i32, i32
  }
  func.func @transform_6(%arg0: i32) -> (i32, i32) {
    %c0_i32 = arith.constant 0 : i32
    %c0_i32_0 = arith.constant 0 : i32
    %c0_i32_1 = arith.constant 0 : i32
    return %c0_i32, %c0_i32_0 : i32, i32
  }
  func.func @transform_7(%arg0: i32) -> (i32, i32) {
    %c0_i32 = arith.constant 0 : i32
    %c0_i32_0 = arith.constant 0 : i32
    %c0_i32_1 = arith.constant 0 : i32
    return %c0_i32, %c0_i32_0 : i32, i32
  }
  func.func @transform_8(%arg0: i32) -> (i32, i32) {
    %c0_i32 = arith.constant 0 : i32
    %c0_i32_0 = arith.constant 0 : i32
    %c0_i32_1 = arith.constant 0 : i32
    return %c0_i32, %c0_i32_0 : i32, i32
  }
  func.func @transform_9(%arg0: i32) -> (i32, i32) {
    %c0_i32 = arith.constant 0 : i32
    %c0_i32_0 = arith.constant 0 : i32
    %c0_i32_1 = arith.constant 0 : i32
    return %c0_i32, %c0_i32_0 : i32, i32
  }
  func.func @transform_10(%arg0: i32) -> (i32, i32) {
    %c0_i32 = arith.constant 0 : i32
    %c0_i32_0 = arith.constant 0 : i32
    %c0_i32_1 = arith.constant 0 : i32
    return %c0_i32, %c0_i32_0 : i32, i32
  }
  func.func @transform_11(%arg0: i32) -> (i32, i32, i32) {
    %c0_i32 = arith.constant 0 : i32
    %c0_i32_0 = arith.constant 0 : i32
    %c0_i32_1 = arith.constant 0 : i32
    return %arg0, %c0_i32, %c0_i32_0 : i32, i32, i32
  }
}

</mosaic_0001>

<llo_original>
// kernel: coor_attention.1
$region0: #{coor_attention.1}
  #allocation0 [shape = 'u32[]', space=smem, size = 0x4, offset = 0x4, fixed_abs, tag = 'smem constant byte address 0x4 - core index']
  #allocation1 [shape = 'u32[144,128]{1,0:T(1,128)}', space=vmem, size = 0x12000, scoped, tag = 'internal scratch']
  %s0 = inlined_call_operand.vmem [shape: f32[2,16,256], index: 0, kind: input, shape index: {}]
  %s1 = inlined_call_operand.vmem [shape: f32[256,16], index: 1, kind: input, shape index: {}]
  %s2 = inlined_call_operand.vmem [shape: f32[256,16], index: 2, kind: input, shape index: {}]
  %s3 = inlined_call_operand.vmem [shape: f32[16,256], index: 3, kind: input, shape index: {}]
  %s4 = inlined_call_operand.vmem [shape: f32[16,256], index: 4, kind: input, shape index: {}]
  %s5 = inlined_call_operand.vmem [shape: f32[8,16], index: 5, kind: input, shape index: {}]
  %s6 = inlined_call_operand.vmem [shape: f32[8,1], index: 6, kind: input, shape index: {}]
  %s7 = inlined_call_operand.vmem [shape: f32[16,8], index: 7, kind: input, shape index: {}]
  %s8 = inlined_call_operand.vmem [shape: f32[16,1], index: 8, kind: input, shape index: {}]
  %s9 = inlined_call_operand.vmem [shape: f32[16,8], index: 9, kind: input, shape index: {}]
  %s10 = inlined_call_operand.vmem [shape: f32[16,1], index: 10, kind: input, shape index: {}]
  %s11 = inlined_call_operand.vmem [shape: f32[2,16,256], index: 11, kind: output, shape index: {}]
  %s12 = sld [smem:[#allocation0]]
  $region77: #{coor_attention.1} parent=0
    _
  %s14 = ssub.s32 1, %s12
  %s15 = scalar_select 0, %s14, %s12
  loop: start=0, step=1, limit=4
  $region2: #{coor_attention.1} parent=0 // loop_pre_header
    _
  $region3: #{coor_attention.1} parent=0 // loop_header
    %s17 = sphi 0, %s21
    %p18 = scmp.ge.s32.totalorder %s17, 4
    %s27 = sphi 0, %s29
    %s30 = sphi 0, %s27
    %s31 = sphi 0, %s30
    %s47 = sphi 0, %s31
    %s51 = sphi 0, %s51
    %s53 = sphi 0, %s51
    %s54 = sphi 0, %s53
    %s68 = sphi 0, %s54
    %s72 = sphi 0, %s72
    %s74 = sphi 0, %s72
    %s75 = sphi 0, %s74
    %s89 = sphi 0, %s75
    %s93 = sphi 0, %s93
    %s95 = sphi 0, %s93
    %s96 = sphi 0, %s95
    %s110 = sphi 0, %s96
    %s114 = sphi 0, %s114
    %s116 = sphi 0, %s114
    %s117 = sphi 0, %s116
    %s131 = sphi 0, %s117
    %s135 = sphi 0, %s135
    %s137 = sphi 0, %s135
    %s138 = sphi 0, %s137
    %s152 = sphi 0, %s138
    %s156 = sphi 0, %s156
    %s158 = sphi 0, %s156
    %s159 = sphi 0, %s158
    %s173 = sphi 0, %s159
    %s177 = sphi 0, %s177
    %s179 = sphi 0, %s177
    %s180 = sphi 0, %s179
    %s194 = sphi 0, %s180
    %s198 = sphi 0, %s198
    %s200 = sphi 0, %s198
    %s201 = sphi 0, %s200
    %s215 = sphi 0, %s201
    %s219 = sphi 0, %s219
    %s221 = sphi 0, %s219
    %s222 = sphi 0, %s221
    %s236 = sphi 0, %s222
    %s240 = sphi 0, %s240
    %s242 = sphi 0, %s240
    %s243 = sphi 0, %s242
    %s257 = sphi 0, %s243
    %s263 = sphi 0, %s265
    %s266 = sphi 0, %s263
    %s267 = sphi 0, %s266
    %s283 = sphi 0, %s267
  $region4: #{coor_attention.1} parent=0 // loop_header_branch
    %20 = sbr.rel (%p18) target = $region8
  $region5: #{coor_attention.1} parent=0 // loop_body
    %s22 = ssub.s32 %s17, 1
    %s23 = ssub.s32 %s17, 2
    %s24 = sadd.s32 %s17, 1
    %s25 = ssub.s32 %s17, %s24
    %p26 = scmp.eq.s32.totalorder %s25, 0
    %s28 = sadd.s32 %s27, 1
    %s29 = scalar_select %p26, %s27, %s28
    %p32 = pneg %p26
    %p33 = scmp.eq.s32.totalorder %s17, 1
    %p34 = por %p32, %p33
    %p35 = scmp.ne.s32.totalorder %s27, %s30
    %p36 = scmp.eq.s32.totalorder %s17, 0
    %p37 = por %p35, %p36
    %p38 = scmp.ne.s32.totalorder %s27, %s30
    %p39 = scmp.eq.s32.totalorder %s22, 1
    %p40 = por %p38, %p39
    %p41 = scmp.ne.s32.totalorder %s30, %s31
    %p42 = scmp.eq.s32.totalorder %s22, 0
    %p43 = por %p41, %p42
    %p44 = scmp.ne.s32.totalorder %s30, %s31
    %p45 = scmp.eq.s32.totalorder %s23, 1
    %p46 = por %p44, %p45
    %p48 = scmp.ne.s32.totalorder %s31, %s47
    %p49 = scmp.eq.s32.totalorder %s23, 0
    %p50 = por %p48, %p49
    %s52 = sadd.s32 %s51, 1
    %p55 = scmp.eq.s32.totalorder %s17, 1
    %p56 = scmp.ne.s32.totalorder %s51, %s53
    %p57 = scmp.eq.s32.totalorder %s17, 0
    %p58 = por %p56, %p57
    %p59 = scmp.ne.s32.totalorder %s51, %s53
    %p60 = scmp.eq.s32.totalorder %s22, 1
    %p61 = por %p59, %p60
    %p62 = scmp.ne.s32.totalorder %s53, %s54
    %p63 = scmp.eq.s32.totalorder %s22, 0
    %p64 = por %p62, %p63
    %p65 = scmp.ne.s32.totalorder %s53, %s54
    %p66 = scmp.eq.s32.totalorder %s23, 1
    %p67 = por %p65, %p66
    %p69 = scmp.ne.s32.totalorder %s54, %s68
    %p70 = scmp.eq.s32.totalorder %s23, 0
    %p71 = por %p69, %p70
    %s73 = sadd.s32 %s72, 1
    %p76 = scmp.eq.s32.totalorder %s17, 1
    %p77 = scmp.ne.s32.totalorder %s72, %s74
    %p78 = scmp.eq.s32.totalorder %s17, 0
    %p79 = por %p77, %p78
    %p80 = scmp.ne.s32.totalorder %s72, %s74
    %p81 = scmp.eq.s32.totalorder %s22, 1
    %p82 = por %p80, %p81
    %p83 = scmp.ne.s32.totalorder %s74, %s75
    %p84 = scmp.eq.s32.totalorder %s22, 0
    %p85 = por %p83, %p84
    %p86 = scmp.ne.s32.totalorder %s74, %s75
    %p87 = scmp.eq.s32.totalorder %s23, 1
    %p88 = por %p86, %p87
    %p90 = scmp.ne.s32.totalorder %s75, %s89
    %p91 = scmp.eq.s32.totalorder %s23, 0
    %p92 = por %p90, %p91
    %s94 = sadd.s32 %s93, 1
    %p97 = scmp.eq.s32.totalorder %s17, 1
    %p98 = scmp.ne.s32.totalorder %s93, %s95
    %p99 = scmp.eq.s32.totalorder %s17, 0
    %p100 = por %p98, %p99
    %p101 = scmp.ne.s32.totalorder %s93, %s95
    %p102 = scmp.eq.s32.totalorder %s22, 1
    %p103 = por %p101, %p102
    %p104 = scmp.ne.s32.totalorder %s95, %s96
    %p105 = scmp.eq.s32.totalorder %s22, 0
    %p106 = por %p104, %p105
    %p107 = scmp.ne.s32.totalorder %s95, %s96
    %p108 = scmp.eq.s32.totalorder %s23, 1
    %p109 = por %p107, %p108
    %p111 = scmp.ne.s32.totalorder %s96, %s110
    %p112 = scmp.eq.s32.totalorder %s23, 0
    %p113 = por %p111, %p112
    %s115 = sadd.s32 %s114, 1
    %p118 = scmp.eq.s32.totalorder %s17, 1
    %p119 = scmp.ne.s32.totalorder %s114, %s116
    %p120 = scmp.eq.s32.totalorder %s17, 0
    %p121 = por %p119, %p120
    %p122 = scmp.ne.s32.totalorder %s114, %s116
    %p123 = scmp.eq.s32.totalorder %s22, 1
    %p124 = por %p122, %p123
    %p125 = scmp.ne.s32.totalorder %s116, %s117
    %p126 = scmp.eq.s32.totalorder %s22, 0
    %p127 = por %p125, %p126
    %p128 = scmp.ne.s32.totalorder %s116, %s117
    %p129 = scmp.eq.s32.totalorder %s23, 1
    %p130 = por %p128, %p129
    %p132 = scmp.ne.s32.totalorder %s117, %s131
    %p133 = scmp.eq.s32.totalorder %s23, 0
    %p134 = por %p132, %p133
    %s136 = sadd.s32 %s135, 1
    %p139 = scmp.eq.s32.totalorder %s17, 1
    %p140 = scmp.ne.s32.totalorder %s135, %s137
    %p141 = scmp.eq.s32.totalorder %s17, 0
    %p142 = por %p140, %p141
    %p143 = scmp.ne.s32.totalorder %s135, %s137
    %p144 = scmp.eq.s32.totalorder %s22, 1
    %p145 = por %p143, %p144
    %p146 = scmp.ne.s32.totalorder %s137, %s138
    %p147 = scmp.eq.s32.totalorder %s22, 0
    %p148 = por %p146, %p147
    %p149 = scmp.ne.s32.totalorder %s137, %s138
    %p150 = scmp.eq.s32.totalorder %s23, 1
    %p151 = por %p149, %p150
    %p153 = scmp.ne.s32.totalorder %s138, %s152
    %p154 = scmp.eq.s32.totalorder %s23, 0
    %p155 = por %p153, %p154
    %s157 = sadd.s32 %s156, 1
    %p160 = scmp.eq.s32.totalorder %s17, 1
    %p161 = scmp.ne.s32.totalorder %s156, %s158
    %p162 = scmp.eq.s32.totalorder %s17, 0
    %p163 = por %p161, %p162
    %p164 = scmp.ne.s32.totalorder %s156, %s158
    %p165 = scmp.eq.s32.totalorder %s22, 1
    %p166 = por %p164, %p165
    %p167 = scmp.ne.s32.totalorder %s158, %s159
    %p168 = scmp.eq.s32.totalorder %s22, 0
    %p169 = por %p167, %p168
    %p170 = scmp.ne.s32.totalorder %s158, %s159
    %p171 = scmp.eq.s32.totalorder %s23, 1
    %p172 = por %p170, %p171
    %p174 = scmp.ne.s32.totalorder %s159, %s173
    %p175 = scmp.eq.s32.totalorder %s23, 0
    %p176 = por %p174, %p175
    %s178 = sadd.s32 %s177, 1
    %p181 = scmp.eq.s32.totalorder %s17, 1
    %p182 = scmp.ne.s32.totalorder %s177, %s179
    %p183 = scmp.eq.s32.totalorder %s17, 0
    %p184 = por %p182, %p183
    %p185 = scmp.ne.s32.totalorder %s177, %s179
    %p186 = scmp.eq.s32.totalorder %s22, 1
    %p187 = por %p185, %p186
    %p188 = scmp.ne.s32.totalorder %s179, %s180
    %p189 = scmp.eq.s32.totalorder %s22, 0
    %p190 = por %p188, %p189
    %p191 = scmp.ne.s32.totalorder %s179, %s180
    %p192 = scmp.eq.s32.totalorder %s23, 1
    %p193 = por %p191, %p192
    %p195 = scmp.ne.s32.totalorder %s180, %s194
    %p196 = scmp.eq.s32.totalorder %s23, 0
    %p197 = por %p195, %p196
    %s199 = sadd.s32 %s198, 1
    %p202 = scmp.eq.s32.totalorder %s17, 1
    %p203 = scmp.ne.s32.totalorder %s198, %s200
    %p204 = scmp.eq.s32.totalorder %s17, 0
    %p205 = por %p203, %p204
    %p206 = scmp.ne.s32.totalorder %s198, %s200
    %p207 = scmp.eq.s32.totalorder %s22, 1
    %p208 = por %p206, %p207
    %p209 = scmp.ne.s32.totalorder %s200, %s201
    %p210 = scmp.eq.s32.totalorder %s22, 0
    %p211 = por %p209, %p210
    %p212 = scmp.ne.s32.totalorder %s200, %s201
    %p213 = scmp.eq.s32.totalorder %s23, 1
    %p214 = por %p212, %p213
    %p216 = scmp.ne.s32.totalorder %s201, %s215
    %p217 = scmp.eq.s32.totalorder %s23, 0
    %p218 = por %p216, %p217
    %s220 = sadd.s32 %s219, 1
    %p223 = scmp.eq.s32.totalorder %s17, 1
    %p224 = scmp.ne.s32.totalorder %s219, %s221
    %p225 = scmp.eq.s32.totalorder %s17, 0
    %p226 = por %p224, %p225
    %p227 = scmp.ne.s32.totalorder %s219, %s221
    %p228 = scmp.eq.s32.totalorder %s22, 1
    %p229 = por %p227, %p228
    %p230 = scmp.ne.s32.totalorder %s221, %s222
    %p231 = scmp.eq.s32.totalorder %s22, 0
    %p232 = por %p230, %p231
    %p233 = scmp.ne.s32.totalorder %s221, %s222
    %p234 = scmp.eq.s32.totalorder %s23, 1
    %p235 = por %p233, %p234
    %p237 = scmp.ne.s32.totalorder %s222, %s236
    %p238 = scmp.eq.s32.totalorder %s23, 0
    %p239 = por %p237, %p238
    %s241 = sadd.s32 %s240, 1
    %p244 = scmp.eq.s32.totalorder %s17, 1
    %p245 = scmp.ne.s32.totalorder %s240, %s242
    %p246 = scmp.eq.s32.totalorder %s17, 0
    %p247 = por %p245, %p246
    %p248 = scmp.ne.s32.totalorder %s240, %s242
    %p249 = scmp.eq.s32.totalorder %s22, 1
    %p250 = por %p248, %p249
    %p251 = scmp.ne.s32.totalorder %s242, %s243
    %p252 = scmp.eq.s32.totalorder %s22, 0
    %p253 = por %p251, %p252
    %p254 = scmp.ne.s32.totalorder %s242, %s243
    %p255 = scmp.eq.s32.totalorder %s23, 1
    %p256 = por %p254, %p255
    %p258 = scmp.ne.s32.totalorder %s243, %s257
    %p259 = scmp.eq.s32.totalorder %s23, 0
    %p260 = por %p258, %p259
    %s261 = ssub.s32 %s17, %s24
    %p262 = scmp.eq.s32.totalorder %s261, 0
    %s264 = sadd.s32 %s263, 1
    %s265 = scalar_select %p262, %s263, %s264
    %p268 = pneg %p262
    %p269 = scmp.eq.s32.totalorder %s17, 1
    %p270 = por %p268, %p269
    %p271 = scmp.ne.s32.totalorder %s263, %s266
    %p272 = scmp.eq.s32.totalorder %s17, 0
    %p273 = por %p271, %p272
    %p274 = scmp.ne.s32.totalorder %s263, %s266
    %p275 = scmp.eq.s32.totalorder %s22, 1
    %p276 = por %p274, %p275
    %p277 = scmp.ne.s32.totalorder %s266, %s267
    %p278 = scmp.eq.s32.totalorder %s22, 0
    %p279 = por %p277, %p278
    %p280 = scmp.ne.s32.totalorder %s266, %s267
    %p281 = scmp.eq.s32.totalorder %s23, 1
    %p282 = por %p280, %p281
    %p284 = scmp.ne.s32.totalorder %s267, %s283
    %p285 = scmp.eq.s32.totalorder %s23, 0
    %p286 = por %p284, %p285
    %p287 = scmp.le.s32.totalorder 1, %s17
    %p288 = scmp.lt.s32.totalorder %s17, 3
    %p289 = pnand %p287, %p288
    %p290 = pneg %p289
    // Predicated region
    $region9: #{coor_attention.1} parent=5 // pred_check
      _
    $region10: #{coor_attention.1} parent=5 // pred_check_branch
      %292 = sbr.rel (%p289) target = $region12
    $region11: #{coor_attention.1} parent=5 // pred_region
      %s293 = ssub.s32 %s17, 1
      // Predicated region
      $region13: #{coor_attention.1} parent=11 // pred_check
        %p294 = pneg %p64
      $region14: #{coor_attention.1} parent=11 // pred_check_branch
        %296 = sbr.rel (%p294) target = $region16
      $region15: #{coor_attention.1} parent=11 // pred_region
        _
      $region16: #{coor_attention.1} parent=11 // pred_fallthru
        _
      // Predicated region
      $region17: #{coor_attention.1} parent=11 // pred_check
        %p297 = pneg %p85
      $region18: #{coor_attention.1} parent=11 // pred_check_branch
        %299 = sbr.rel (%p297) target = $region20
      $region19: #{coor_attention.1} parent=11 // pred_region
        _
      $region20: #{coor_attention.1} parent=11 // pred_fallthru
        _
      // Predicated region
      $region21: #{coor_attention.1} parent=11 // pred_check
        %p300 = pneg %p106
      $region22: #{coor_attention.1} parent=11 // pred_check_branch
        %302 = sbr.rel (%p300) target = $region24
      $region23: #{coor_attention.1} parent=11 // pred_region
        _
      $region24: #{coor_attention.1} parent=11 // pred_fallthru
        _
      // Predicated region
      $region25: #{coor_attention.1} parent=11 // pred_check
        %p303 = pneg %p127
      $region26: #{coor_attention.1} parent=11 // pred_check_branch
        %305 = sbr.rel (%p303) target = $region28
      $region27: #{coor_attention.1} parent=11 // pred_region
        _
      $region28: #{coor_attention.1} parent=11 // pred_fallthru
        _
      // Predicated region
      $region29: #{coor_attention.1} parent=11 // pred_check
        %p306 = pneg %p148
      $region30: #{coor_attention.1} parent=11 // pred_check_branch
        %308 = sbr.rel (%p306) target = $region32
      $region31: #{coor_attention.1} parent=11 // pred_region
        _
      $region32: #{coor_attention.1} parent=11 // pred_fallthru
        _
      // Predicated region
      $region33: #{coor_attention.1} parent=11 // pred_check
        %p309 = pneg %p169
      $region34: #{coor_attention.1} parent=11 // pred_check_branch
        %311 = sbr.rel (%p309) target = $region36
      $region35: #{coor_attention.1} parent=11 // pred_region
        _
      $region36: #{coor_attention.1} parent=11 // pred_fallthru
        _
      // Predicated region
      $region37: #{coor_attention.1} parent=11 // pred_check
        %p312 = pneg %p190
      $region38: #{coor_attention.1} parent=11 // pred_check_branch
        %314 = sbr.rel (%p312) target = $region40
      $region39: #{coor_attention.1} parent=11 // pred_region
        _
      $region40: #{coor_attention.1} parent=11 // pred_fallthru
        _
      // Predicated region
      $region41: #{coor_attention.1} parent=11 // pred_check
        %p315 = pneg %p211
      $region42: #{coor_attention.1} parent=11 // pred_check_branch
        %317 = sbr.rel (%p315) target = $region44
      $region43: #{coor_attention.1} parent=11 // pred_region
        _
      $region44: #{coor_attention.1} parent=11 // pred_fallthru
        _
      // Predicated region
      $region45: #{coor_attention.1} parent=11 // pred_check
        %p318 = pneg %p232
      $region46: #{coor_attention.1} parent=11 // pred_check_branch
        %320 = sbr.rel (%p318) target = $region48
      $region47: #{coor_attention.1} parent=11 // pred_region
        _
      $region48: #{coor_attention.1} parent=11 // pred_fallthru
        _
      // Predicated region
      $region49: #{coor_attention.1} parent=11 // pred_check
        %p321 = pneg %p253
      $region50: #{coor_attention.1} parent=11 // pred_check_branch
        %323 = sbr.rel (%p321) target = $region52
      $region51: #{coor_attention.1} parent=11 // pred_region
        _
      $region52: #{coor_attention.1} parent=11 // pred_fallthru
        _
    $region12: #{coor_attention.1} parent=5 // pred_fallthru
      _
    %p324 = scmp.lt.s32.totalorder %s17, 2
    // Predicated region
    $region53: #{coor_attention.1} parent=5 // pred_check
      %p325 = pneg %p324
    $region54: #{coor_attention.1} parent=5 // pred_check_branch
      %327 = sbr.rel (%p325) target = $region56
    $region55: #{coor_attention.1} parent=5 // pred_region
      // Predicated region
      $region57: #{coor_attention.1} parent=55 // pred_check
        %p328 = pneg %p37
      $region58: #{coor_attention.1} parent=55 // pred_check_branch
        %330 = sbr.rel (%p328) target = $region60
      $region59: #{coor_attention.1} parent=55 // pred_region
        %p331 = scmp.lt.s32.totalorder %s17, 1
        %s332 = scalar_select %p331, %s17, 1
        %s333 = smul.addr %s332, 4
        %s334 = smul.addr %s333, 8
        %s335 = scalar_lea.vmem %s0, %s334
      $region60: #{coor_attention.1} parent=55 // pred_fallthru
        _
    $region56: #{coor_attention.1} parent=5 // pred_fallthru
      _
    %p336 = scmp.le.s32.totalorder 1, %s17
    %p337 = scmp.lt.s32.totalorder %s17, 3
    %p338 = pnand %p336, %p337
    %p339 = pneg %p338
    // Predicated region
    $region61: #{coor_attention.1} parent=5 // pred_check
      _
    $region62: #{coor_attention.1} parent=5 // pred_check_branch
      %341 = sbr.rel (%p338) target = $region64
    $region63: #{coor_attention.1} parent=5 // pred_region
      %s342 = ssub.s32 %s17, 1
      %p343 = scmp.lt.s32.totalorder %s22, 1
      %s344 = scalar_select %p343, %s22, 1
      %s345 = smul.addr %s344, 4
      %s346 = smul.addr %s345, 8
      %s347 = scalar_lea.vmem %s0, %s346
      %p348 = pneg %p43
      %p349 = pneg %p40
      %p350 = pneg %p64
      %p351 = pneg %p61
      %p352 = pneg %p85
      %p353 = pneg %p82
      %p354 = pneg %p106
      %p355 = pneg %p103
      %p356 = pneg %p127
      %p357 = pneg %p124
      %p358 = pneg %p148
      %p359 = pneg %p145
      %p360 = pneg %p169
      %p361 = pneg %p166
      %p362 = pneg %p190
      %p363 = pneg %p187
      %p364 = pneg %p211
      %p365 = pneg %p208
      %p366 = pneg %p232
      %p367 = pneg %p229
      %p368 = pneg %p253
      %p369 = pneg %p250
      %p370 = pneg %p279
      %p371 = pneg %p276
      %p372 = scmp.lt.s32.totalorder %s22, 1
      %s373 = scalar_select %p372, %s22, 1
      %s374 = smul.addr %s373, 4
      %s375 = smul.addr %s374, 8
      %s376 = scalar_lea.vmem %s11, %s375
      %p377 = scmp.lt.s32.totalorder %s22, 1
      %s378 = scalar_select %p377, %s22, 1
      %s379 = smul.addr %s378, 4
      %s380 = smul.addr %s379, 8
      %s381 = scalar_lea.vmem %s0, %s380
      %p382 = scmp.lt.s32.totalorder %s22, 1
      %s383 = scalar_select %p382, %s22, 1
      %s384 = smul.addr %s383, 4
      %s385 = smul.addr %s384, 8
      %s386 = scalar_lea.vmem %s11, %s385
      %v387 = vld [vmem:[%s381] sm:$0xff]
      %v388 = vld [vmem:[%s381 + $0x8] sm:$0xff]
      %v389 = vld [vmem:[%s381 + $0x10] sm:$0xff]
      %v390 = vld [vmem:[%s381 + $0x18] sm:$0xff]
      %v391 = vld [vmem:[%s1] sm:$0xff]
      %v392 = vld [vmem:[%s1 + $0x8] sm:$0xff]
      %v393 = vld [vmem:[%s1 + $0x10] sm:$0xff]
      %v394 = vld [vmem:[%s1 + $0x18] sm:$0xff]
      %v395 = vld [vmem:[%s1 + $0x20] sm:$0xff]
      %v396 = vld [vmem:[%s1 + $0x28] sm:$0xff]
      %v397 = vld [vmem:[%s1 + $0x30] sm:$0xff]
      %v398 = vld [vmem:[%s1 + $0x38] sm:$0xff]
      %v399 = vld [vmem:[%s1 + $0x40] sm:$0xff]
      %v400 = vld [vmem:[%s1 + $0x48] sm:$0xff]
      %v401 = vld [vmem:[%s1 + $0x50] sm:$0xff]
      %v402 = vld [vmem:[%s1 + $0x58] sm:$0xff]
      %v403 = vld [vmem:[%s1 + $0x60] sm:$0xff]
      %v404 = vld [vmem:[%s1 + $0x68] sm:$0xff]
      %v405 = vld [vmem:[%s1 + $0x70] sm:$0xff]
      %v406 = vld [vmem:[%s1 + $0x78] sm:$0xff]
      %v407 = vld [vmem:[%s1 + $0x80] sm:$0xff]
      %v408 = vld [vmem:[%s1 + $0x88] sm:$0xff]
      %v409 = vld [vmem:[%s1 + $0x90] sm:$0xff]
      %v410 = vld [vmem:[%s1 + $0x98] sm:$0xff]
      %v411 = vld [vmem:[%s1 + $0xa0] sm:$0xff]
      %v412 = vld [vmem:[%s1 + $0xa8] sm:$0xff]
      %v413 = vld [vmem:[%s1 + $0xb0] sm:$0xff]
      %v414 = vld [vmem:[%s1 + $0xb8] sm:$0xff]
      %v415 = vld [vmem:[%s1 + $0xc0] sm:$0xff]
      %v416 = vld [vmem:[%s1 + $0xc8] sm:$0xff]
      %v417 = vld [vmem:[%s1 + $0xd0] sm:$0xff]
      %v418 = vld [vmem:[%s1 + $0xd8] sm:$0xff]
      %v419 = vld [vmem:[%s1 + $0xe0] sm:$0xff]
      %v420 = vld [vmem:[%s1 + $0xe8] sm:$0xff]
      %v421 = vld [vmem:[%s1 + $0xf0] sm:$0xff]
      %v422 = vld [vmem:[%s1 + $0xf8] sm:$0xff]
      %423 = vmatprep.subr.mxu0 0.0
      %424 = vmatpush1.msra.mxu0 %v391
      %425 = vmatprep.subr.mxu0 0.0
      %426 = vmatpush1.msra.mxu0 %v392
      %427 = vmatprep.subr.mxu0 0.0
      %428 = vmatpush1.msra.mxu0 %v393
      %429 = vmatprep.subr.mxu0 0.0
      %430 = vmatpush1.msra.mxu0 %v394
      %431 = vmatprep.subr.mxu0 0.0
      %432 = vmatpush1.msra.mxu0 %v395
      %433 = vmatprep.subr.mxu0 0.0
      %434 = vmatpush1.msra.mxu0 %v396
      %435 = vmatprep.subr.mxu0 0.0
      %436 = vmatpush1.msra.mxu0 %v397
      %437 = vmatprep.subr.mxu0 0.0
      %438 = vmatpush1.msra.mxu0 %v398
      %439 = vmatprep.subr.mxu0 0.0
      %440 = vmatpush1.msra.mxu0 %v399
      %441 = vmatprep.subr.mxu0 0.0
      %442 = vmatpush1.msra.mxu0 %v400
      %443 = vmatprep.subr.mxu0 0.0
      %444 = vmatpush1.msra.mxu0 %v401
      %445 = vmatprep.subr.mxu0 0.0
      %446 = vmatpush1.msra.mxu0 %v402
      %447 = vmatprep.subr.mxu0 0.0
      %448 = vmatpush1.msra.mxu0 %v403
      %449 = vmatprep.subr.mxu0 0.0
      %450 = vmatpush1.msra.mxu0 %v404
      %451 = vmatprep.subr.mxu0 0.0
      %452 = vmatpush1.msra.mxu0 %v405
      %453 = vmatprep.subr.mxu0 0.0
      %454 = vmatpush1.msra.mxu0 %v406
      %455 = vmatprep.subr.mxu0 0.0
      %456 = vmatpush1.msra.mxu0 %v407
      %457 = vmatprep.subr.mxu0 0.0
      %458 = vmatpush1.msra.mxu0 %v408
      %459 = vmatprep.subr.mxu0 0.0
      %460 = vmatpush1.msra.mxu0 %v409
      %461 = vmatprep.subr.mxu0 0.0
      %462 = vmatpush1.msra.mxu0 %v410
      %463 = vmatprep.subr.mxu0 0.0
      %464 = vmatpush1.msra.mxu0 %v411
      %465 = vmatprep.subr.mxu0 0.0
      %466 = vmatpush1.msra.mxu0 %v412
      %467 = vmatprep.subr.mxu0 0.0
      %468 = vmatpush1.msra.mxu0 %v413
      %469 = vmatprep.subr.mxu0 0.0
      %470 = vmatpush1.msra.mxu0 %v414
      %471 = vmatprep.subr.mxu0 0.0
      %472 = vmatpush1.msra.mxu0 %v415
      %473 = vmatprep.subr.mxu0 0.0
      %474 = vmatpush1.msra.mxu0 %v416
      %475 = vmatprep.subr.mxu0 0.0
      %476 = vmatpush1.msra.mxu0 %v417
      %477 = vmatprep.subr.mxu0 0.0
      %478 = vmatpush1.msra.mxu0 %v418
      %479 = vmatprep.subr.mxu0 0.0
      %480 = vmatpush1.msra.mxu0 %v419
      %481 = vmatprep.subr.mxu0 0.0
      %482 = vmatpush1.msra.mxu0 %v420
      %483 = vmatprep.subr.mxu0 0.0
      %484 = vmatpush1.msra.mxu0 %v421
      %485 = vmatprep.subr.mxu0 0.0
      %486 = vmatpush1.msra.mxu0 %v422
      %487 = vmatprep.mubr.f32.mxu0 %v388
      %488 = vmatmul.mubr.f32.gmra.mrb[0].mxu0 %v387
      %v489 = vpop.f32.mrb[0].mxu0
      %v490 = vadd.f32 0.0, %v489
      %v491 = vpop.f32.mrb[0].mxu0
      %492 = vmatprep.mubr.f32.mxu0 %v390
      %493 = vmatmul.mubr.f32.gmra.mrb[0].mxu0 %v389
      %v494 = vpop.f32.mrb[0].mxu0
      %v495 = vadd.f32 0.0, %v494
      %v496 = vpop.f32.mrb[0].mxu0
      %497 = vdwg.mxu0
      %v498 = vld [vmem:[%s2] sm:$0xff]
      %v499 = vld [vmem:[%s2 + $0x8] sm:$0xff]
      %v500 = vld [vmem:[%s2 + $0x10] sm:$0xff]
      %v501 = vld [vmem:[%s2 + $0x18] sm:$0xff]
      %v502 = vld [vmem:[%s2 + $0x20] sm:$0xff]
      %v503 = vld [vmem:[%s2 + $0x28] sm:$0xff]
      %v504 = vld [vmem:[%s2 + $0x30] sm:$0xff]
      %v505 = vld [vmem:[%s2 + $0x38] sm:$0xff]
      %v506 = vld [vmem:[%s2 + $0x40] sm:$0xff]
      %v507 = vld [vmem:[%s2 + $0x48] sm:$0xff]
      %v508 = vld [vmem:[%s2 + $0x50] sm:$0xff]
      %v509 = vld [vmem:[%s2 + $0x58] sm:$0xff]
      %v510 = vld [vmem:[%s2 + $0x60] sm:$0xff]
      %v511 = vld [vmem:[%s2 + $0x68] sm:$0xff]
      %v512 = vld [vmem:[%s2 + $0x70] sm:$0xff]
      %v513 = vld [vmem:[%s2 + $0x78] sm:$0xff]
      %v514 = vld [vmem:[%s2 + $0x80] sm:$0xff]
      %v515 = vld [vmem:[%s2 + $0x88] sm:$0xff]
      %v516 = vld [vmem:[%s2 + $0x90] sm:$0xff]
      %v517 = vld [vmem:[%s2 + $0x98] sm:$0xff]
      %v518 = vld [vmem:[%s2 + $0xa0] sm:$0xff]
      %v519 = vld [vmem:[%s2 + $0xa8] sm:$0xff]
      %v520 = vld [vmem:[%s2 + $0xb0] sm:$0xff]
      %v521 = vld [vmem:[%s2 + $0xb8] sm:$0xff]
      %v522 = vld [vmem:[%s2 + $0xc0] sm:$0xff]
      %v523 = vld [vmem:[%s2 + $0xc8] sm:$0xff]
      %v524 = vld [vmem:[%s2 + $0xd0] sm:$0xff]
      %v525 = vld [vmem:[%s2 + $0xd8] sm:$0xff]
      %v526 = vld [vmem:[%s2 + $0xe0] sm:$0xff]
      %v527 = vld [vmem:[%s2 + $0xe8] sm:$0xff]
      %v528 = vld [vmem:[%s2 + $0xf0] sm:$0xff]
      %v529 = vld [vmem:[%s2 + $0xf8] sm:$0xff]
      %530 = vmatprep.subr.mxu0 0.0
      %531 = vmatpush1.msra.mxu0 %v498
      %532 = vmatprep.subr.mxu0 0.0
      %533 = vmatpush1.msra.mxu0 %v499
      %534 = vmatprep.subr.mxu0 0.0
      %535 = vmatpush1.msra.mxu0 %v500
      %536 = vmatprep.subr.mxu0 0.0
      %537 = vmatpush1.msra.mxu0 %v501
      %538 = vmatprep.subr.mxu0 0.0
      %539 = vmatpush1.msra.mxu0 %v502
      %540 = vmatprep.subr.mxu0 0.0
      %541 = vmatpush1.msra.mxu0 %v503
      %542 = vmatprep.subr.mxu0 0.0
      %543 = vmatpush1.msra.mxu0 %v504
      %544 = vmatprep.subr.mxu0 0.0
      %545 = vmatpush1.msra.mxu0 %v505
      %546 = vmatprep.subr.mxu0 0.0
      %547 = vmatpush1.msra.mxu0 %v506
      %548 = vmatprep.subr.mxu0 0.0
      %549 = vmatpush1.msra.mxu0 %v507
      %550 = vmatprep.subr.mxu0 0.0
      %551 = vmatpush1.msra.mxu0 %v508
      %552 = vmatprep.subr.mxu0 0.0
      %553 = vmatpush1.msra.mxu0 %v509
      %554 = vmatprep.subr.mxu0 0.0
      %555 = vmatpush1.msra.mxu0 %v510
      %556 = vmatprep.subr.mxu0 0.0
      %557 = vmatpush1.msra.mxu0 %v511
      %558 = vmatprep.subr.mxu0 0.0
      %559 = vmatpush1.msra.mxu0 %v512
      %560 = vmatprep.subr.mxu0 0.0
      %561 = vmatpush1.msra.mxu0 %v513
      %562 = vmatprep.subr.mxu0 0.0
      %563 = vmatpush1.msra.mxu0 %v514
      %564 = vmatprep.subr.mxu0 0.0
      %565 = vmatpush1.msra.mxu0 %v515
      %566 = vmatprep.subr.mxu0 0.0
      %567 = vmatpush1.msra.mxu0 %v516
      %568 = vmatprep.subr.mxu0 0.0
      %569 = vmatpush1.msra.mxu0 %v517
      %570 = vmatprep.subr.mxu0 0.0
      %571 = vmatpush1.msra.mxu0 %v518
      %572 = vmatprep.subr.mxu0 0.0
      %573 = vmatpush1.msra.mxu0 %v519
      %574 = vmatprep.subr.mxu0 0.0
      %575 = vmatpush1.msra.mxu0 %v520
      %576 = vmatprep.subr.mxu0 0.0
      %577 = vmatpush1.msra.mxu0 %v521
      %578 = vmatprep.subr.mxu0 0.0
      %579 = vmatpush1.msra.mxu0 %v522
      %580 = vmatprep.subr.mxu0 0.0
      %581 = vmatpush1.msra.mxu0 %v523
      %582 = vmatprep.subr.mxu0 0.0
      %583 = vmatpush1.msra.mxu0 %v524
      %584 = vmatprep.subr.mxu0 0.0
      %585 = vmatpush1.msra.mxu0 %v525
      %586 = vmatprep.subr.mxu0 0.0
      %587 = vmatpush1.msra.mxu0 %v526
      %588 = vmatprep.subr.mxu0 0.0
      %589 = vmatpush1.msra.mxu0 %v527
      %590 = vmatprep.subr.mxu0 0.0
      %591 = vmatpush1.msra.mxu0 %v528
      %592 = vmatprep.subr.mxu0 0.0
      %593 = vmatpush1.msra.mxu0 %v529
      %594 = vmatprep.mubr.f32.mxu0 %v388
      %595 = vmatmul.mubr.f32.gmra.mrb[0].mxu0 %v387
      %v596 = vpop.f32.mrb[0].mxu0
      %v597 = vadd.f32 0.0, %v596
      %v598 = vpop.f32.mrb[0].mxu0
      %599 = vmatprep.mubr.f32.mxu0 %v390
      %600 = vmatmul.mubr.f32.gmra.mrb[0].mxu0 %v389
      %v601 = vpop.f32.mrb[0].mxu0
      %v602 = vadd.f32 0.0, %v601
      %v603 = vpop.f32.mrb[0].mxu0
      %604 = vdwg.mxu0
      %v605 = vld [vmem:[%s5] sm:$0xff]
      %v606 = vld [vmem:[%s6] sm:$0xff]
      %v607 = vld [vmem:[%s7] sm:$0xff]
      %v608 = vld [vmem:[%s7 + $0x8] sm:$0xff]
      %v609 = vld [vmem:[%s8] sm:$0xff]
      %v610 = vld [vmem:[%s8 + $0x8] sm:$0xff]
      %v611 = vld [vmem:[%s9] sm:$0xff]
      %v612 = vld [vmem:[%s9 + $0x8] sm:$0xff]
      %v613 = vld [vmem:[%s10] sm:$0xff]
      %v614 = vld [vmem:[%s10 + $0x8] sm:$0xff]
      %616 = vset.pattern.permute.xlu0 0
      %617 = vperm.xlu0 %616, %v606
      %v618 = vpop.permute.xlu0 %617
      %vm620 = vcmask 130048
      %v622 = vsel %vm620, %v605, 0
      %624 = vmatprep.subr.mxu0 0.0
      %625 = vmatpush1.msra.mxu0 %v490
      %626 = vmatprep.subr.mxu0 0.0
      %627 = vmatpush1.msra.mxu0 %v495
      %628 = vmatprep.subr.mxu0 0.0
      %629 = vmatpush1.msra.mxu0 0.0
      %630 = vmatprep.subr.mxu0 0.0
      %631 = vmatpush1.msra.mxu0 0.0
      %632 = vmatprep.subr.mxu0 0.0
      %633 = vmatpush1.msra.mxu0 0.0
      %634 = vmatprep.subr.mxu0 0.0
      %635 = vmatpush1.msra.mxu0 0.0
      %636 = vmatprep.subr.mxu0 0.0
      %637 = vmatpush1.msra.mxu0 0.0
      %638 = vmatprep.subr.mxu0 0.0
      %639 = vmatpush1.msra.mxu0 0.0
      %640 = vmatprep.subr.mxu0 0.0
      %641 = vmatpush1.msra.mxu0 0.0
      %642 = vmatprep.subr.mxu0 0.0
      %643 = vmatpush1.msra.mxu0 0.0
      %644 = vmatprep.subr.mxu0 0.0
      %645 = vmatpush1.msra.mxu0 0.0
      %646 = vmatprep.subr.mxu0 0.0
      %647 = vmatpush1.msra.mxu0 0.0
      %648 = vmatprep.subr.mxu0 0.0
      %649 = vmatpush1.msra.mxu0 0.0
      %650 = vmatprep.subr.mxu0 0.0
      %651 = vmatpush1.msra.mxu0 0.0
      %652 = vmatprep.subr.mxu0 0.0
      %653 = vmatpush1.msra.mxu0 0.0
      %654 = vmatprep.subr.mxu0 0.0
      %655 = vmatpush1.msra.mxu0 0.0
      %656 = vmatprep.subr.mxu0 0.0
      %657 = vmatpush1.msra.mxu0 0.0
      %658 = vmatprep.subr.mxu0 0.0
      %659 = vmatpush1.msra.mxu0 0.0
      %660 = vmatprep.subr.mxu0 0.0
      %661 = vmatpush1.msra.mxu0 0.0
      %662 = vmatprep.subr.mxu0 0.0
      %663 = vmatpush1.msra.mxu0 0.0
      %664 = vmatprep.subr.mxu0 0.0
      %665 = vmatpush1.msra.mxu0 0.0
      %666 = vmatprep.subr.mxu0 0.0
      %667 = vmatpush1.msra.mxu0 0.0
      %668 = vmatprep.subr.mxu0 0.0
      %669 = vmatpush1.msra.mxu0 0.0
      %670 = vmatprep.subr.mxu0 0.0
      %671 = vmatpush1.msra.mxu0 0.0
      %672 = vmatprep.subr.mxu0 0.0
      %673 = vmatpush1.msra.mxu0 0.0
      %674 = vmatprep.subr.mxu0 0.0
      %675 = vmatpush1.msra.mxu0 0.0
      %676 = vmatprep.subr.mxu0 0.0
      %677 = vmatpush1.msra.mxu0 0.0
      %678 = vmatprep.subr.mxu0 0.0
      %679 = vmatpush1.msra.mxu0 0.0
      %680 = vmatprep.subr.mxu0 0.0
      %681 = vmatpush1.msra.mxu0 0.0
      %682 = vmatprep.subr.mxu0 0.0
      %683 = vmatpush1.msra.mxu0 0.0
      %684 = vmatprep.subr.mxu0 0.0
      %685 = vmatpush1.msra.mxu0 0.0
      %686 = vmatprep.subr.mxu0 0.0
      %687 = vmatpush1.msra.mxu0 0.0
      %688 = vmatprep.mubr.f32.mxu0 0.0
      %689 = vmatmul.mubr.f32.gmra.mrb[0].mxu0 %v622
      %v690 = vpop.f32.mrb[0].mxu0
      %v691 = vadd.f32 %v618, %v690
      %v692 = vpop.f32.mrb[0].mxu0
      %693 = vdwg.mxu0
      %v694 = vadd.f32 %v691, 3.0
      %v695 = vmax.f32 %v694, 0.0
      %v696 = vmin.f32 %v695, 6.0
      %v697 = vrcp.pop 6.0
      %v698 = vmul.f32 %v696, %v697
      %v699 = vmul.f32 %v691, %v698
      %700 = vmatprep.subr.mxu0 0.0
      %701 = vmatpush1.msra.mxu0 %v597
      %702 = vmatprep.subr.mxu0 0.0
      %703 = vmatpush1.msra.mxu0 %v602
      %704 = vmatprep.subr.mxu0 0.0
      %705 = vmatpush1.msra.mxu0 0.0
      %706 = vmatprep.subr.mxu0 0.0
      %707 = vmatpush1.msra.mxu0 0.0
      %708 = vmatprep.subr.mxu0 0.0
      %709 = vmatpush1.msra.mxu0 0.0
      %710 = vmatprep.subr.mxu0 0.0
      %711 = vmatpush1.msra.mxu0 0.0
      %712 = vmatprep.subr.mxu0 0.0
      %713 = vmatpush1.msra.mxu0 0.0
      %714 = vmatprep.subr.mxu0 0.0
      %715 = vmatpush1.msra.mxu0 0.0
      %716 = vmatprep.subr.mxu0 0.0
      %717 = vmatpush1.msra.mxu0 0.0
      %718 = vmatprep.subr.mxu0 0.0
      %719 = vmatpush1.msra.mxu0 0.0
      %720 = vmatprep.subr.mxu0 0.0
      %721 = vmatpush1.msra.mxu0 0.0
      %722 = vmatprep.subr.mxu0 0.0
      %723 = vmatpush1.msra.mxu0 0.0
      %724 = vmatprep.subr.mxu0 0.0
      %725 = vmatpush1.msra.mxu0 0.0
      %726 = vmatprep.subr.mxu0 0.0
      %727 = vmatpush1.msra.mxu0 0.0
      %728 = vmatprep.subr.mxu0 0.0
      %729 = vmatpush1.msra.mxu0 0.0
      %730 = vmatprep.subr.mxu0 0.0
      %731 = vmatpush1.msra.mxu0 0.0
      %732 = vmatprep.subr.mxu0 0.0
      %733 = vmatpush1.msra.mxu0 0.0
      %734 = vmatprep.subr.mxu0 0.0
      %735 = vmatpush1.msra.mxu0 0.0
      %736 = vmatprep.subr.mxu0 0.0
      %737 = vmatpush1.msra.mxu0 0.0
      %738 = vmatprep.subr.mxu0 0.0
      %739 = vmatpush1.msra.mxu0 0.0
      %740 = vmatprep.subr.mxu0 0.0
      %741 = vmatpush1.msra.mxu0 0.0
      %742 = vmatprep.subr.mxu0 0.0
      %743 = vmatpush1.msra.mxu0 0.0
      %744 = vmatprep.subr.mxu0 0.0
      %745 = vmatpush1.msra.mxu0 0.0
      %746 = vmatprep.subr.mxu0 0.0
      %747 = vmatpush1.msra.mxu0 0.0
      %748 = vmatprep.subr.mxu0 0.0
      %749 = vmatpush1.msra.mxu0 0.0
      %750 = vmatprep.subr.mxu0 0.0
      %751 = vmatpush1.msra.mxu0 0.0
      %752 = vmatprep.subr.mxu0 0.0
      %753 = vmatpush1.msra.mxu0 0.0
      %754 = vmatprep.subr.mxu0 0.0
      %755 = vmatpush1.msra.mxu0 0.0
      %756 = vmatprep.subr.mxu0 0.0
      %757 = vmatpush1.msra.mxu0 0.0
      %758 = vmatprep.subr.mxu0 0.0
      %759 = vmatpush1.msra.mxu0 0.0
      %760 = vmatprep.subr.mxu0 0.0
      %761 = vmatpush1.msra.mxu0 0.0
      %762 = vmatprep.subr.mxu0 0.0
      %763 = vmatpush1.msra.mxu0 0.0
      %764 = vmatprep.mubr.f32.mxu0 0.0
      %765 = vmatmul.mubr.f32.gmra.mrb[0].mxu0 %v622
      %v766 = vpop.f32.mrb[0].mxu0
      %v767 = vadd.f32 %v618, %v766
      %v768 = vpop.f32.mrb[0].mxu0
      %769 = vdwg.mxu0
      %v770 = vadd.f32 %v767, 3.0
      %v771 = vmax.f32 %v770, 0.0
      %v772 = vmin.f32 %v771, 6.0
      %v773 = vmul.f32 %v772, %v697
      %v774 = vmul.f32 %v767, %v773
      %776 = vset.pattern.permute.xlu0 0
      %777 = vperm.xlu0 %776, %v609
      %v778 = vpop.permute.xlu0 %777
      %781 = vset.pattern.permute.xlu0 0
      %782 = vperm.xlu0 %781, %v610
      %v783 = vpop.permute.xlu0 %782
      %vm785 = vcmask 64512
      %v787 = vsel %vm785, %v607, 0
      %v790 = vsel %vm785, %v608, 0
      %792 = vmatprep.subr.mxu0 0.0
      %793 = vmatpush1.msra.mxu0 %v699
      %794 = vmatprep.subr.mxu0 0.0
      %795 = vmatpush1.msra.mxu0 0.0
      %796 = vmatprep.subr.mxu0 0.0
      %797 = vmatpush1.msra.mxu0 0.0
      %798 = vmatprep.subr.mxu0 0.0
      %799 = vmatpush1.msra.mxu0 0.0
      %800 = vmatprep.subr.mxu0 0.0
      %801 = vmatpush1.msra.mxu0 0.0
      %802 = vmatprep.subr.mxu0 0.0
      %803 = vmatpush1.msra.mxu0 0.0
      %804 = vmatprep.subr.mxu0 0.0
      %805 = vmatpush1.msra.mxu0 0.0
      %806 = vmatprep.subr.mxu0 0.0
      %807 = vmatpush1.msra.mxu0 0.0
      %808 = vmatprep.subr.mxu0 0.0
      %809 = vmatpush1.msra.mxu0 0.0
      %810 = vmatprep.subr.mxu0 0.0
      %811 = vmatpush1.msra.mxu0 0.0
      %812 = vmatprep.subr.mxu0 0.0
      %813 = vmatpush1.msra.mxu0 0.0
      %814 = vmatprep.subr.mxu0 0.0
      %815 = vmatpush1.msra.mxu0 0.0
      %816 = vmatprep.subr.mxu0 0.0
      %817 = vmatpush1.msra.mxu0 0.0
      %818 = vmatprep.subr.mxu0 0.0
      %819 = vmatpush1.msra.mxu0 0.0
      %820 = vmatprep.subr.mxu0 0.0
      %821 = vmatpush1.msra.mxu0 0.0
      %822 = vmatprep.subr.mxu0 0.0
      %823 = vmatpush1.msra.mxu0 0.0
      %824 = vmatprep.subr.mxu0 0.0
      %825 = vmatpush1.msra.mxu0 0.0
      %826 = vmatprep.subr.mxu0 0.0
      %827 = vmatpush1.msra.mxu0 0.0
      %828 = vmatprep.subr.mxu0 0.0
      %829 = vmatpush1.msra.mxu0 0.0
      %830 = vmatprep.subr.mxu0 0.0
      %831 = vmatpush1.msra.mxu0 0.0
      %832 = vmatprep.subr.mxu0 0.0
      %833 = vmatpush1.msra.mxu0 0.0
      %834 = vmatprep.subr.mxu0 0.0
      %835 = vmatpush1.msra.mxu0 0.0
      %836 = vmatprep.subr.mxu0 0.0
      %837 = vmatpush1.msra.mxu0 0.0
      %838 = vmatprep.subr.mxu0 0.0
      %839 = vmatpush1.msra.mxu0 0.0
      %840 = vmatprep.subr.mxu0 0.0
      %841 = vmatpush1.msra.mxu0 0.0
      %842 = vmatprep.subr.mxu0 0.0
      %843 = vmatpush1.msra.mxu0 0.0
      %844 = vmatprep.subr.mxu0 0.0
      %845 = vmatpush1.msra.mxu0 0.0
      %846 = vmatprep.subr.mxu0 0.0
      %847 = vmatpush1.msra.mxu0 0.0
      %848 = vmatprep.subr.mxu0 0.0
      %849 = vmatpush1.msra.mxu0 0.0
      %850 = vmatprep.subr.mxu0 0.0
      %851 = vmatpush1.msra.mxu0 0.0
      %852 = vmatprep.subr.mxu0 0.0
      %853 = vmatpush1.msra.mxu0 0.0
      %854 = vmatprep.subr.mxu0 0.0
      %855 = vmatpush1.msra.mxu0 0.0
      %856 = vmatprep.mubr.f32.mxu0 0.0
      %857 = vmatmul.mubr.f32.gmra.mrb[0].mxu0 %v787
      %v858 = vpop.f32.mrb[0].mxu0
      %v859 = vadd.f32 %v778, %v858
      %v860 = vpop.f32.mrb[0].mxu0
      %861 = vmatprep.mubr.f32.mxu0 0.0
      %862 = vmatmul.mubr.f32.gmra.mrb[0].mxu0 %v790
      %v863 = vpop.f32.mrb[0].mxu0
      %v864 = vadd.f32 %v783, %v863
      %v865 = vpop.f32.mrb[0].mxu0
      %866 = vdwg.mxu0
      %v867 = vxor.u32 %v859, 2147483648
      %v868 = vxor.u32 %v864, 2147483648
      %v869 = vmul.f32 %v867, 1.442695
      %v870 = vpow.pop %v869
      %v871 = vmul.f32 %v868, 1.442695
      %v872 = vpow.pop %v871
      %v873 = vadd.f32 %v870, 1.0
      %v874 = vadd.f32 %v872, 1.0
      %v875 = vrcp.pop %v873
      %v876 = vmul.f32 1.0, %v875
      %v877 = vrcp.pop %v874
      %v878 = vmul.f32 1.0, %v877
      %880 = vset.pattern.permute.xlu0 0
      %881 = vperm.xlu0 %880, %v613
      %v882 = vpop.permute.xlu0 %881
      %885 = vset.pattern.permute.xlu0 0
      %886 = vperm.xlu0 %885, %v614
      %v887 = vpop.permute.xlu0 %886
      %v890 = vsel %vm785, %v611, 0
      %v893 = vsel %vm785, %v612, 0
      %895 = vmatprep.subr.mxu0 0.0
      %896 = vmatpush1.msra.mxu0 %v774
      %897 = vmatprep.subr.mxu0 0.0
      %898 = vmatpush1.msra.mxu0 0.0
      %899 = vmatprep.subr.mxu0 0.0
      %900 = vmatpush1.msra.mxu0 0.0
      %901 = vmatprep.subr.mxu0 0.0
      %902 = vmatpush1.msra.mxu0 0.0
      %903 = vmatprep.subr.mxu0 0.0
      %904 = vmatpush1.msra.mxu0 0.0
      %905 = vmatprep.subr.mxu0 0.0
      %906 = vmatpush1.msra.mxu0 0.0
      %907 = vmatprep.subr.mxu0 0.0
      %908 = vmatpush1.msra.mxu0 0.0
      %909 = vmatprep.subr.mxu0 0.0
      %910 = vmatpush1.msra.mxu0 0.0
      %911 = vmatprep.subr.mxu0 0.0
      %912 = vmatpush1.msra.mxu0 0.0
      %913 = vmatprep.subr.mxu0 0.0
      %914 = vmatpush1.msra.mxu0 0.0
      %915 = vmatprep.subr.mxu0 0.0
      %916 = vmatpush1.msra.mxu0 0.0
      %917 = vmatprep.subr.mxu0 0.0
      %918 = vmatpush1.msra.mxu0 0.0
      %919 = vmatprep.subr.mxu0 0.0
      %920 = vmatpush1.msra.mxu0 0.0
      %921 = vmatprep.subr.mxu0 0.0
      %922 = vmatpush1.msra.mxu0 0.0
      %923 = vmatprep.subr.mxu0 0.0
      %924 = vmatpush1.msra.mxu0 0.0
      %925 = vmatprep.subr.mxu0 0.0
      %926 = vmatpush1.msra.mxu0 0.0
      %927 = vmatprep.subr.mxu0 0.0
      %928 = vmatpush1.msra.mxu0 0.0
      %929 = vmatprep.subr.mxu0 0.0
      %930 = vmatpush1.msra.mxu0 0.0
      %931 = vmatprep.subr.mxu0 0.0
      %932 = vmatpush1.msra.mxu0 0.0
      %933 = vmatprep.subr.mxu0 0.0
      %934 = vmatpush1.msra.mxu0 0.0
      %935 = vmatprep.subr.mxu0 0.0
      %936 = vmatpush1.msra.mxu0 0.0
      %937 = vmatprep.subr.mxu0 0.0
      %938 = vmatpush1.msra.mxu0 0.0
      %939 = vmatprep.subr.mxu0 0.0
      %940 = vmatpush1.msra.mxu0 0.0
      %941 = vmatprep.subr.mxu0 0.0
      %942 = vmatpush1.msra.mxu0 0.0
      %943 = vmatprep.subr.mxu0 0.0
      %944 = vmatpush1.msra.mxu0 0.0
      %945 = vmatprep.subr.mxu0 0.0
      %946 = vmatpush1.msra.mxu0 0.0
      %947 = vmatprep.subr.mxu0 0.0
      %948 = vmatpush1.msra.mxu0 0.0
      %949 = vmatprep.subr.mxu0 0.0
      %950 = vmatpush1.msra.mxu0 0.0
      %951 = vmatprep.subr.mxu0 0.0
      %952 = vmatpush1.msra.mxu0 0.0
      %953 = vmatprep.subr.mxu0 0.0
      %954 = vmatpush1.msra.mxu0 0.0
      %955 = vmatprep.subr.mxu0 0.0
      %956 = vmatpush1.msra.mxu0 0.0
      %957 = vmatprep.subr.mxu0 0.0
      %958 = vmatpush1.msra.mxu0 0.0
      %959 = vmatprep.mubr.f32.mxu0 0.0
      %960 = vmatmul.mubr.f32.gmra.mrb[0].mxu0 %v890
      %v961 = vpop.f32.mrb[0].mxu0
      %v962 = vadd.f32 %v882, %v961
      %v963 = vpop.f32.mrb[0].mxu0
      %964 = vmatprep.mubr.f32.mxu0 0.0
      %965 = vmatmul.mubr.f32.gmra.mrb[0].mxu0 %v893
      %v966 = vpop.f32.mrb[0].mxu0
      %v967 = vadd.f32 %v887, %v966
      %v968 = vpop.f32.mrb[0].mxu0
      %969 = vdwg.mxu0
      %v970 = vxor.u32 %v962, 2147483648
      %v971 = vxor.u32 %v967, 2147483648
      %v972 = vmul.f32 %v970, 1.442695
      %v973 = vpow.pop %v972
      %v974 = vmul.f32 %v971, 1.442695
      %v975 = vpow.pop %v974
      %v976 = vadd.f32 %v973, 1.0
      %v977 = vadd.f32 %v975, 1.0
      %v978 = vrcp.pop %v976
      %v979 = vmul.f32 1.0, %v978
      %v980 = vrcp.pop %v977
      %v981 = vmul.f32 1.0, %v980
      %v982 = vld [vmem:[%s3] sm:$0xff]
      %v983 = vld [vmem:[%s3 + $0x8] sm:$0xff]
      %v984 = vld [vmem:[%s3 + $0x10] sm:$0xff]
      %v985 = vld [vmem:[%s3 + $0x18] sm:$0xff]
      %v987 = vsel %vm620, %v876, 0
      %v990 = vsel %vm620, %v878, 0
      %992 = vmatprep.subr.mxu0 %v983
      %993 = vmatpush1.msra.mxu0 %v982
      %994 = vmatprep.subr.mxu0 %v985
      %995 = vmatpush1.msra.mxu0 %v984
      %996 = vmatprep.subr.mxu0 0.0
      %997 = vmatpush1.msra.mxu0 0.0
      %998 = vmatprep.subr.mxu0 0.0
      %999 = vmatpush1.msra.mxu0 0.0
      %1000 = vmatprep.subr.mxu0 0.0
      %1001 = vmatpush1.msra.mxu0 0.0
      %1002 = vmatprep.subr.mxu0 0.0
      %1003 = vmatpush1.msra.mxu0 0.0
      %1004 = vmatprep.subr.mxu0 0.0
      %1005 = vmatpush1.msra.mxu0 0.0
      %1006 = vmatprep.subr.mxu0 0.0
      %1007 = vmatpush1.msra.mxu0 0.0
      %1008 = vmatprep.subr.mxu0 0.0
      %1009 = vmatpush1.msra.mxu0 0.0
      %1010 = vmatprep.subr.mxu0 0.0
      %1011 = vmatpush1.msra.mxu0 0.0
      %1012 = vmatprep.subr.mxu0 0.0
      %1013 = vmatpush1.msra.mxu0 0.0
      %1014 = vmatprep.subr.mxu0 0.0
      %1015 = vmatpush1.msra.mxu0 0.0
      %1016 = vmatprep.subr.mxu0 0.0
      %1017 = vmatpush1.msra.mxu0 0.0
      %1018 = vmatprep.subr.mxu0 0.0
      %1019 = vmatpush1.msra.mxu0 0.0
      %1020 = vmatprep.subr.mxu0 0.0
      %1021 = vmatpush1.msra.mxu0 0.0
      %1022 = vmatprep.subr.mxu0 0.0
      %1023 = vmatpush1.msra.mxu0 0.0
      %1024 = vmatprep.subr.mxu0 0.0
      %1025 = vmatpush1.msra.mxu0 0.0
      %1026 = vmatprep.subr.mxu0 0.0
      %1027 = vmatpush1.msra.mxu0 0.0
      %1028 = vmatprep.subr.mxu0 0.0
      %1029 = vmatpush1.msra.mxu0 0.0
      %1030 = vmatprep.subr.mxu0 0.0
      %1031 = vmatpush1.msra.mxu0 0.0
      %1032 = vmatprep.subr.mxu0 0.0
      %1033 = vmatpush1.msra.mxu0 0.0
      %1034 = vmatprep.subr.mxu0 0.0
      %1035 = vmatpush1.msra.mxu0 0.0
      %1036 = vmatprep.subr.mxu0 0.0
      %1037 = vmatpush1.msra.mxu0 0.0
      %1038 = vmatprep.subr.mxu0 0.0
      %1039 = vmatpush1.msra.mxu0 0.0
      %1040 = vmatprep.subr.mxu0 0.0
      %1041 = vmatpush1.msra.mxu0 0.0
      %1042 = vmatprep.subr.mxu0 0.0
      %1043 = vmatpush1.msra.mxu0 0.0
      %1044 = vmatprep.subr.mxu0 0.0
      %1045 = vmatpush1.msra.mxu0 0.0
      %1046 = vmatprep.subr.mxu0 0.0
      %1047 = vmatpush1.msra.mxu0 0.0
      %1048 = vmatprep.subr.mxu0 0.0
      %1049 = vmatpush1.msra.mxu0 0.0
      %1050 = vmatprep.subr.mxu0 0.0
      %1051 = vmatpush1.msra.mxu0 0.0
      %1052 = vmatprep.subr.mxu0 0.0
      %1053 = vmatpush1.msra.mxu0 0.0
      %1054 = vmatprep.subr.mxu0 0.0
      %1055 = vmatpush1.msra.mxu0 0.0
      %1056 = vmatprep.mubr.f32.mxu0 0.0
      %1057 = vmatmul.mubr.f32.gmra.mrb[0].mxu0 %v987
      %v1058 = vpop.f32.mrb[0].mxu0
      %v1059 = vadd.f32 0.0, %v1058
      %v1060 = vpop.f32.mrb[0].mxu0
      %v1061 = vadd.f32 0.0, %v1060
      %1062 = vmatprep.mubr.f32.mxu0 0.0
      %1063 = vmatmul.mubr.f32.gmra.mrb[0].mxu0 %v990
      %v1064 = vpop.f32.mrb[0].mxu0
      %v1065 = vadd.f32 0.0, %v1064
      %v1066 = vpop.f32.mrb[0].mxu0
      %v1067 = vadd.f32 0.0, %v1066
      %1068 = vdwg.mxu0
      %v1069 = vld [vmem:[%s4] sm:$0xff]
      %v1070 = vld [vmem:[%s4 + $0x8] sm:$0xff]
      %v1071 = vld [vmem:[%s4 + $0x10] sm:$0xff]
      %v1072 = vld [vmem:[%s4 + $0x18] sm:$0xff]
      %v1074 = vsel %vm620, %v979, 0
      %v1077 = vsel %vm620, %v981, 0
      %1079 = vmatprep.subr.mxu0 %v1070
      %1080 = vmatpush1.msra.mxu0 %v1069
      %1081 = vmatprep.subr.mxu0 %v1072
      %1082 = vmatpush1.msra.mxu0 %v1071
      %1083 = vmatprep.subr.mxu0 0.0
      %1084 = vmatpush1.msra.mxu0 0.0
      %1085 = vmatprep.subr.mxu0 0.0
      %1086 = vmatpush1.msra.mxu0 0.0
      %1087 = vmatprep.subr.mxu0 0.0
      %1088 = vmatpush1.msra.mxu0 0.0
      %1089 = vmatprep.subr.mxu0 0.0
      %1090 = vmatpush1.msra.mxu0 0.0
      %1091 = vmatprep.subr.mxu0 0.0
      %1092 = vmatpush1.msra.mxu0 0.0
      %1093 = vmatprep.subr.mxu0 0.0
      %1094 = vmatpush1.msra.mxu0 0.0
      %1095 = vmatprep.subr.mxu0 0.0
      %1096 = vmatpush1.msra.mxu0 0.0
      %1097 = vmatprep.subr.mxu0 0.0
      %1098 = vmatpush1.msra.mxu0 0.0
      %1099 = vmatprep.subr.mxu0 0.0
      %1100 = vmatpush1.msra.mxu0 0.0
      %1101 = vmatprep.subr.mxu0 0.0
      %1102 = vmatpush1.msra.mxu0 0.0
      %1103 = vmatprep.subr.mxu0 0.0
      %1104 = vmatpush1.msra.mxu0 0.0
      %1105 = vmatprep.subr.mxu0 0.0
      %1106 = vmatpush1.msra.mxu0 0.0
      %1107 = vmatprep.subr.mxu0 0.0
      %1108 = vmatpush1.msra.mxu0 0.0
      %1109 = vmatprep.subr.mxu0 0.0
      %1110 = vmatpush1.msra.mxu0 0.0
      %1111 = vmatprep.subr.mxu0 0.0
      %1112 = vmatpush1.msra.mxu0 0.0
      %1113 = vmatprep.subr.mxu0 0.0
      %1114 = vmatpush1.msra.mxu0 0.0
      %1115 = vmatprep.subr.mxu0 0.0
      %1116 = vmatpush1.msra.mxu0 0.0
      %1117 = vmatprep.subr.mxu0 0.0
      %1118 = vmatpush1.msra.mxu0 0.0
      %1119 = vmatprep.subr.mxu0 0.0
      %1120 = vmatpush1.msra.mxu0 0.0
      %1121 = vmatprep.subr.mxu0 0.0
      %1122 = vmatpush1.msra.mxu0 0.0
      %1123 = vmatprep.subr.mxu0 0.0
      %1124 = vmatpush1.msra.mxu0 0.0
      %1125 = vmatprep.subr.mxu0 0.0
      %1126 = vmatpush1.msra.mxu0 0.0
      %1127 = vmatprep.subr.mxu0 0.0
      %1128 = vmatpush1.msra.mxu0 0.0
      %1129 = vmatprep.subr.mxu0 0.0
      %1130 = vmatpush1.msra.mxu0 0.0
      %1131 = vmatprep.subr.mxu0 0.0
      %1132 = vmatpush1.msra.mxu0 0.0
      %1133 = vmatprep.subr.mxu0 0.0
      %1134 = vmatpush1.msra.mxu0 0.0
      %1135 = vmatprep.subr.mxu0 0.0
      %1136 = vmatpush1.msra.mxu0 0.0
      %1137 = vmatprep.subr.mxu0 0.0
      %1138 = vmatpush1.msra.mxu0 0.0
      %1139 = vmatprep.subr.mxu0 0.0
      %1140 = vmatpush1.msra.mxu0 0.0
      %1141 = vmatprep.subr.mxu0 0.0
      %1142 = vmatpush1.msra.mxu0 0.0
      %1143 = vmatprep.mubr.f32.mxu0 0.0
      %1144 = vmatmul.mubr.f32.gmra.mrb[0].mxu0 %v1074
      %v1145 = vpop.f32.mrb[0].mxu0
      %v1146 = vadd.f32 0.0, %v1145
      %v1147 = vpop.f32.mrb[0].mxu0
      %v1148 = vadd.f32 0.0, %v1147
      %1149 = vmatprep.mubr.f32.mxu0 0.0
      %1150 = vmatmul.mubr.f32.gmra.mrb[0].mxu0 %v1077
      %v1151 = vpop.f32.mrb[0].mxu0
      %v1152 = vadd.f32 0.0, %v1151
      %v1153 = vpop.f32.mrb[0].mxu0
      %v1154 = vadd.f32 0.0, %v1153
      %1155 = vdwg.mxu0
      %v1156 = vmul.f32 %v1059, %v1146
      %v1157 = vmul.f32 %v1061, %v1148
      %v1158 = vmul.f32 %v1065, %v1152
      %v1159 = vmul.f32 %v1067, %v1154
      %v1160 = vmul.f32 %v387, %v1156
      %v1161 = vmul.f32 %v388, %v1157
      %v1162 = vmul.f32 %v389, %v1158
      %v1163 = vmul.f32 %v390, %v1159
      %1164 = vst [vmem:[%s386] sm:$0xff] %v1160
      %1165 = vst [vmem:[%s386 + $0x8] sm:$0xff] %v1161
      %1166 = vst [vmem:[%s386 + $0x10] sm:$0xff] %v1162
      %1167 = vst [vmem:[%s386 + $0x18] sm:$0xff] %v1163
      %p1168 = scmp.lt.s32.totalorder %s22, 1
      %s1169 = scalar_select %p1168, %s22, 1
      %s1170 = smul.addr %s1169, 4
      %s1171 = smul.addr %s1170, 8
      %s1172 = scalar_lea.vmem %s11, %s1171
      // Predicated region
      $region65: #{coor_attention.1} parent=63 // pred_check
        %p1173 = pneg %p276
      $region66: #{coor_attention.1} parent=63 // pred_check_branch
        %1175 = sbr.rel (%p1173) target = $region68
      $region67: #{coor_attention.1} parent=63 // pred_region
        _
      $region68: #{coor_attention.1} parent=63 // pred_fallthru
        _
    $region64: #{coor_attention.1} parent=5 // pred_fallthru
      _
    %p1176 = scmp.le.s32.totalorder 2, %s17
    // Predicated region
    $region69: #{coor_attention.1} parent=5 // pred_check
      %p1177 = pneg %p1176
    $region70: #{coor_attention.1} parent=5 // pred_check_branch
      %1179 = sbr.rel (%p1177) target = $region72
    $region71: #{coor_attention.1} parent=5 // pred_region
      %s1180 = ssub.s32 %s17, 2
      // Predicated region
      $region73: #{coor_attention.1} parent=71 // pred_check
        %p1181 = pneg %p282
      $region74: #{coor_attention.1} parent=71 // pred_check_branch
        %1183 = sbr.rel (%p1181) target = $region76
      $region75: #{coor_attention.1} parent=71 // pred_region
        %p1184 = scmp.lt.s32.totalorder %s23, 1
        %s1185 = scalar_select %p1184, %s23, 1
        %s1186 = smul.addr %s1185, 4
        %s1187 = smul.addr %s1186, 8
        %s1188 = scalar_lea.vmem %s11, %s1187
      $region76: #{coor_attention.1} parent=71 // pred_fallthru
        _
    $region72: #{coor_attention.1} parent=5 // pred_fallthru
      _
  $region6: #{coor_attention.1} parent=0 // loop_footer
    %s21 = sadd.s32 1, %s17
  $region7: #{coor_attention.1} parent=0 // loop_footer_branch
    %16 = sbr.rel target = $region3
  $region8: #{coor_attention.1} parent=0 // loop_exit
    _

</llo_original>
